<compile_context>
chip_gen: v7x
topology: tpu7x:2x2x1
jax: 0.10.0
libtpu: 0.0.40
codegen_flags: <defaults>
</compile_context>

<pallas_src>
import functools
import numpy as np

import jax
import jax.numpy as jnp
from jax.experimental import pallas as pl
from jax.experimental.pallas import tpu as pltpu


LANE = 128   # TPU lane width: pad all feature dims to this
SUB = 8      # sublane granularity: pad row counts to this

_VMEM = pl.BlockSpec(memory_space=pltpu.MemorySpace.VMEM)


# ----------------------------------------------------------------------------------
# MP_GeoLinear eval-mode weight transform (plain JAX glue, run once per weight):
#   w <- normalize(w) ; w <- w * gain / sqrt(fan_in)
# ----------------------------------------------------------------------------------
def prep_geolinear_weight(w, gain=1.0, eps=1e-4):
    w = w.astype(jnp.float32)                                   # (O, I)
    o, i = w.shape
    norm = jnp.linalg.norm(w, axis=1, keepdims=True)            # vector_norm over dim 1
    norm = eps + norm * np.sqrt(o / (o * i))                    # alpha = sqrt(norm.numel()/w.numel())
    w = w / norm
    return w * (gain / np.sqrt(i))                              # w[0].numel() == I


def _pad2(w, rows, cols):
    r, c = w.shape
    return jnp.pad(w, ((0, rows - r), (0, cols - c)))


def _round_up(n, m):
    return int(np.ceil(max(n, 1) / m) * m)


# ----------------------------------------------------------------------------------
# Pallas kernels
# ----------------------------------------------------------------------------------
def _linear_kernel(x_ref, wt_ref, o_ref):
    # x: (N, 128), wt: (128, 128) -> o: (N, 128); lane-dense store.
    o_ref[...] = jnp.dot(
        x_ref[...], wt_ref[...], preferred_element_type=jnp.float32
    ).astype(o_ref.dtype)


def _fused_gnn_kernel(x_ref, row_ref, col_ref, ea_ref,
                      w_in_ref, w_mx_ref, w_me_ref, w_res_ref, w_out_ref,
                      o_ref):
    # x:   (N, 128) padded node features (zeros beyond F_in)
    # row: (E, 1) int32, col: (1, E) int32   (padded edges hold an out-of-range sentinel)
    # ea:  (E, 128) padded edge attributes
    # w_in: (128,128)  w_mx/w_me/w_res: (L,128,128)  w_out: (128,128)
    n_pad = x_ref.shape[0]
    e_pad = ea_ref.shape[0]
    num_layers = w_mx_ref.shape[0]

    col = col_ref[...]                                          # (1, E)
    row = row_ref[...]                                          # (E, 1)

    # one-hot gather/scatter matrices, built ONCE (edge_index is layer-invariant)
    mask_agg = (jax.lax.broadcasted_iota(jnp.int32, (n_pad, e_pad), 0) == col
                ).astype(jnp.float32)                           # (N, E) scatter-add over col
    mask_gat = (jax.lax.broadcasted_iota(jnp.int32, (e_pad, n_pad), 1) == row
                ).astype(jnp.float32)                           # (E, N) gather x[row]

    deg = jnp.sum(mask_agg, axis=1, keepdims=True)              # (N, 1)
    deg_inv = jnp.where(deg > 0, jax.lax.rsqrt(deg), 0.0)       # deg^{-1/2}, inf -> 0
    has_nbr = deg > 0

    # edge-attr aggregation is x-independent -> once for all layers
    agg_e = jnp.dot(mask_agg, ea_ref[...], preferred_element_type=jnp.float32)   # (N, 128)

    # lin_in (MP_GeoLinear)
    x = jnp.dot(x_ref[...], w_in_ref[...], preferred_element_type=jnp.float32)   # (N, 128)

    inv_sqrt2 = np.float32(1.0 / np.sqrt(2.0))
    for l in range(num_layers):                                 # static, unrolled (L = 2)
        # message passing: gather x_j = x[row], scatter-add over col, scale by deg^{-1/2}
        x_j = jnp.dot(mask_gat, x, preferred_element_type=jnp.float32)            # (E, 128)
        agg_x = jnp.dot(mask_agg, x_j, preferred_element_type=jnp.float32)        # (N, 128)
        # lin_neighbour on mp_cat([wa*weighted, wb*edge_attr]); wa/wb folded into weights
        nbr = (jnp.dot(deg_inv * agg_x, w_mx_ref[l], preferred_element_type=jnp.float32)
               + jnp.dot(agg_e, w_me_ref[l], preferred_element_type=jnp.float32))
        # lin_res residual branch
        res = jnp.dot(x, w_res_ref[l], preferred_element_type=jnp.float32)
        # mp_sum(res, nbr, t=0.5) = (res + nbr)/sqrt(2); isolated nodes keep res only
        x = jnp.where(has_nbr, (res + nbr) * inv_sqrt2, res)

    # lin_out (MP_GeoLinear); lane-dense (N, 128) store
    o_ref[...] = jnp.dot(x, w_out_ref[...],
                         preferred_element_type=jnp.float32).astype(o_ref.dtype)


# ----------------------------------------------------------------------------------
# Standalone MP_GeoLinear (direct translation of the module, 2-D weight branch)
# ----------------------------------------------------------------------------------
def pallas_geolinear(x, w, gain=1.0):
    n, f_in = x.shape
    o, i = w.shape
    assert i == f_in and f_in <= LANE and o <= LANE
    n_pad = _round_up(n, SUB)

    wt = _pad2(prep_geolinear_weight(w, gain=gain).T, LANE, LANE)     # (128, 128)
    x_pad = _pad2(x.astype(jnp.float32), n_pad, LANE)

    out_pad = pl.pallas_call(
        _linear_kernel,
        out_shape=jax.ShapeDtypeStruct((n_pad, LANE), jnp.float32),
        in_specs=[_VMEM, _VMEM],
        out_specs=_VMEM,
        compiler_params=pltpu.CompilerParams(vmem_limit_bytes=32 * 1024 * 1024),
    )(x_pad, wt)
    return out_pad[:n, :o]


# ----------------------------------------------------------------------------------
# Fused MP_GNN forward: weight prep (once) + single pallas_call
# ----------------------------------------------------------------------------------
def prepare_gnn_params(params, edge_dim):
    hidden = params["lin_in"].shape[0]
    out_dim = params["lin_out"].shape[0]
    assert params["lin_in"].shape[1] <= LANE and hidden <= LANE
    assert out_dim <= LANE and edge_dim <= LANE

    # mp_cat(t=0.5) constants, folded into the lin_neighbour weights
    na, nb = hidden, edge_dim
    c_cat = np.sqrt((na + nb) / ((1 - 0.5) ** 2 + 0.5 ** 2))
    wa = np.float32(c_cat / np.sqrt(na) * 0.5)
    wb = np.float32(c_cat / np.sqrt(nb) * 0.5)

    w_mx, w_me, w_res = [], [], []
    for layer in params["convs"]:
        wn = prep_geolinear_weight(layer["w_nbr"])              # (hidden, hidden+edge_dim)
        wr = prep_geolinear_weight(layer["w_res"])              # (hidden, hidden)
        w_mx.append(_pad2(wa * wn[:, :hidden].T, LANE, LANE))   # (128, 128)
        w_me.append(_pad2(wb * wn[:, hidden:].T, LANE, LANE))   # (128, 128)
        w_res.append(_pad2(wr.T, LANE, LANE))                   # (128, 128)

    return {
        "w_in_t": _pad2(prep_geolinear_weight(params["lin_in"]).T, LANE, LANE),
        "w_out_t": _pad2(prep_geolinear_weight(params["lin_out"]).T, LANE, LANE),
        "w_mx": jnp.stack(w_mx),
        "w_me": jnp.stack(w_me),
        "w_res": jnp.stack(w_res),
        "hidden": hidden,
        "out_dim": out_dim,
    }


def mp_gnn_forward(prepped, x, edge_index, edge_attr):
    n, f_in = x.shape
    e, ce = edge_attr.shape
    out_dim = prepped["out_dim"]

    n_pad = _round_up(n, SUB)
    e_pad = _round_up(e, SUB)

    x_pad = _pad2(x.astype(jnp.float32), n_pad, LANE)
    ea_pad = _pad2(edge_attr.astype(jnp.float32), e_pad, LANE)

    row = edge_index[0].astype(jnp.int32)
    col = edge_index[1].astype(jnp.int32)
    sentinel = jnp.int32(n_pad)  # never equals a real node id -> padded edges contribute 0
    row_p = jnp.full((e_pad, 1), sentinel, jnp.int32).at[:e, 0].set(row)
    col_p = jnp.full((1, e_pad), sentinel, jnp.int32).at[0, :e].set(col)

    out_pad = pl.pallas_call(
        _fused_gnn_kernel,
        out_shape=jax.ShapeDtypeStruct((n_pad, LANE), jnp.float32),
        in_specs=[_VMEM] * 9,
        out_specs=_VMEM,
        compiler_params=pltpu.CompilerParams(vmem_limit_bytes=32 * 1024 * 1024),
    )(x_pad, row_p, col_p, ea_pad,
      prepped["w_in_t"], prepped["w_mx"], prepped["w_me"], prepped["w_res"],
      prepped["w_out_t"])

    return out_pad[:n, :out_dim]


# ----------------------------------------------------------------------------------
# Pure-JAX reference (mirrors the PyTorch forward) for correctness checks.
# ----------------------------------------------------------------------------------
def ref_geolinear(x, w, gain=1.0):
    return x @ prep_geolinear_weight(w, gain=gain).T.astype(x.dtype)


def ref_hip_conv(x, row, col, edge_attr, w_nbr, w_res):
    n, ch = x.shape
    e, ce = edge_attr.shape
    deg = jnp.zeros((n,), jnp.float32).at[col].add(1.0)
    deg_inv = jnp.where(deg > 0, deg ** -0.5, 0.0)
    norm = deg_inv[col]
    weighted = x[row] * norm[:, None]
    na, nb = ch, ce
    c = np.sqrt((na + nb) / ((1 - 0.5) ** 2 + 0.5 ** 2))
    wa = c / np.sqrt(na) * 0.5
    wb = c / np.sqrt(nb) * 0.5
    msg = jnp.concatenate([wa * weighted, wb * edge_attr], axis=1)
    agg = jnp.zeros((n, msg.shape[1]), jnp.float32).at[col].add(msg)
    nbr = ref_geolinear(agg, w_nbr)
    res = ref_geolinear(x, w_res)
    join = (res + nbr) / np.sqrt(2.0)
    return jnp.where((deg > 0)[:, None], join, res)


def ref_forward(params, x, edge_index, edge_attr):
    row, col = edge_index[0], edge_index[1]
    x = ref_geolinear(x, params["lin_in"])
    for layer in params["convs"]:
        x = ref_hip_conv(x, row, col, edge_attr, layer["w_nbr"], layer["w_res"])
    return ref_geolinear(x, params["lin_out"])


# ----------------------------------------------------------------------------------
if __name__ == "__main__":
    # Small shapes consistent with the module
    N, F_IN, HIDDEN, OUT, E, EDGE_DIM = 16, 8, 32, 8, 32, 4
    NUM_GNN_LAYERS = 2

    key = jax.random.PRNGKey(0)
    kx, ke, kr, kc, *kw = jax.random.split(key, 5 + 2 + 2 * NUM_GNN_LAYERS)

    x = jax.random.normal(kx, (N, F_IN), jnp.float32)
    edge_attr = jax.random.normal(ke, (E, EDGE_DIM), jnp.float32)
    row = jax.random.randint(kr, (E,), 0, N, jnp.int32)
    col = jax.random.randint(kc, (E,), 0, N, jnp.int32)
    edge_index = jnp.stack([row, col], axis=0)                  # (2, E)

    # torch-convention weights (out, in); lazy dims resolved:
    params = {
        "lin_in": jax.random.normal(kw[0], (HIDDEN, F_IN), jnp.float32),
        "convs": [
            {
                "w_nbr": jax.random.normal(kw[1 + 2 * i], (HIDDEN, HIDDEN + EDGE_DIM), jnp.float32),
                "w_res": jax.random.normal(kw[2 + 2 * i], (HIDDEN, HIDDEN), jnp.float32),
            }
            for i in range(NUM_GNN_LAYERS)
        ],
        "lin_out": jax.random.normal(kw[1 + 2 * NUM_GNN_LAYERS], (OUT, HIDDEN), jnp.float32),
    }

    # ---- standalone MP_GeoLinear (the spec module itself) ----
    lin = jax.block_until_ready(pallas_geolinear(x, params["lin_in"]))
    lin_ref = jax.block_until_ready(ref_geolinear(x, params["lin_in"]))
    assert lin.shape == (N, HIDDEN)
    assert np.allclose(np.asarray(lin), np.asarray(lin_ref), rtol=1e-3, atol=1e-3), (
        np.abs(np.asarray(lin) - np.asarray(lin_ref)).max()
    )

    # ---- fused GNN forward built from MP_GeoLinear layers ----
    prepped = prepare_gnn_params(params, EDGE_DIM)
    out = jax.block_until_ready(mp_gnn_forward(prepped, x, edge_index, edge_attr))

    ref = jax.block_until_ready(ref_forward(params, x, edge_index, edge_attr))
    assert out.shape == (N, OUT) and out.dtype == jnp.float32
    assert np.allclose(np.asarray(out), np.asarray(ref), rtol=2e-3, atol=2e-3), (
        np.abs(np.asarray(out) - np.asarray(ref)).max()
    )

    print("KERNEL_OK")
</pallas_src>

<mosaic_0001>
module attributes {stable_mosaic.version = 11 : i64} {
  func.func @_linear_kernel(%arg0: memref<16x128xf32, #tpu.memory_space<vmem>>, %arg1: memref<128x128xf32, #tpu.memory_space<vmem>>, %arg2: memref<16x128xf32, #tpu.memory_space<vmem>>) attributes {dimension_semantics = [], scalar_prefetch = 0 : i64, scratch_operands = 0 : i64, tpu.core_type = #tpu.core_type<tc>} {
    %c0 = arith.constant 0 : index
    %c0_0 = arith.constant 0 : index
    %0 = vector.load %arg0[%c0, %c0_0] : memref<16x128xf32, #tpu.memory_space<vmem>>, vector<16x128xf32>
    %c0_1 = arith.constant 0 : index
    %c0_2 = arith.constant 0 : index
    %1 = vector.load %arg1[%c0_1, %c0_2] : memref<128x128xf32, #tpu.memory_space<vmem>>, vector<128x128xf32>
    %cst = arith.constant dense<0.000000e+00> : vector<16x128xf32>
    %2 = tpu.matmul %0, %1, %cst {dimension_numbers = #tpu.dot_dimension_numbers<[1], [0], [0], [1], [0, 0, 1, 1], [], []>} : vector<16x128xf32>, vector<128x128xf32>, vector<16x128xf32> -> vector<16x128xf32>
    %c0_3 = arith.constant 0 : index
    %c0_4 = arith.constant 0 : index
    %3 = vector.load %arg2[%c0_3, %c0_4] : memref<16x128xf32, #tpu.memory_space<vmem>>, vector<16x128xf32>
    tpu.vector_store %arg2[%c0_3, %c0_4], %2 {strides = array<i32>} : memref<16x128xf32, #tpu.memory_space<vmem>>, vector<16x128xf32>,
    return
  }
}

</mosaic_0001>

<llo_original>
// kernel: tpu_custom_call.1
$region0: #{tpu_custom_call.1}
  #allocation0 [shape = 'u32[]', space=smem, size = 0x4, offset = 0x4, fixed_abs, tag = 'smem constant byte address 0x4 - core index']
  #allocation1 [shape = 'u32[144,128]{1,0:T(1,128)}', space=vmem, size = 0x12000, scoped, tag = 'internal scratch']
  %s0 = inlined_call_operand.hbm [shape: f32[16,128], index: 0, kind: input, shape index: {}]
  %s1 = inlined_call_operand.hbm [shape: f32[128,128], index: 1, kind: input, shape index: {}]
  %s2 = inlined_call_operand.hbm [shape: f32[16,128], index: 2, kind: output, shape index: {}]
  %s3 = sld [smem:[#allocation0]]
  $region26: #{tpu_custom_call.1} parent=0
    _
  %s5 = ssub.s32 1, %s3
  %s6 = scalar_select 0, %s5, %s3
  $region1: #{tpu_custom_call.1} parent=0
    #allocation2 [shape = 'u8[8192]{0}', space=vmem, size = 0x2000, scoped, tag = 'input window, operand 0, single buffered']
    #allocation3 [shape = 's32[1]{0}', space=sflag, size = 0x4, scoped, tag = 'scoped memory for tpu_custom_call.1']
    #allocation4 [shape = 's32[1]{0}', space=sflag, size = 0x4, scoped, tag = 'scoped memory for tpu_custom_call.1']
    #allocation5 [shape = 'u8[65536]{0}', space=vmem, size = 0x10000, scoped, tag = 'input window, operand 1, single buffered']
    #allocation6 [shape = 's32[1]{0}', space=sflag, size = 0x4, scoped, tag = 'scoped memory for tpu_custom_call.1']
    #allocation7 [shape = 'u8[8192]{0}', space=vmem, size = 0x2000, scoped, tag = 'output window, operand 0, single buffered']
    %7 = vsyncpa [#allocation3], 0
    %8 = vsyncpa [#allocation6], 0
    %9 = vsyncpa [#allocation4], 0
    // Predicated region
    $region2: #{tpu_custom_call.1} parent=1 // pred_check
      _
    $region3: #{tpu_custom_call.1} parent=1 // pred_check_branch
      %11 = sbr.rel (0) target = $region5
    $region4: #{tpu_custom_call.1} parent=1 // pred_region
      %s13 = ssub.s32 256, 256
      %14 = vsyncadd [#allocation3], %s13
      %s15 = sshll.u32 [#allocation2], 4
      %s16 = int_to_ptr.vmem [resolvable:$true] %s15
      %21 = dma.hbm_to_vmem [thread:$0]  %s0, 256, %s16, [#allocation3], 128, 128, 8
    $region5: #{tpu_custom_call.1} parent=1 // pred_fallthru
      _
    // Predicated region
    $region6: #{tpu_custom_call.1} parent=1 // pred_check
      _
    $region7: #{tpu_custom_call.1} parent=1 // pred_check_branch
      %23 = sbr.rel (0) target = $region9
    $region8: #{tpu_custom_call.1} parent=1 // pred_region
      %s25 = ssub.s32 2048, 2048
      %26 = vsyncadd [#allocation6], %s25
      %s27 = sshll.u32 [#allocation5], 4
      %s28 = int_to_ptr.vmem [resolvable:$true] %s27
      %33 = dma.hbm_to_vmem [thread:$0]  %s1, 2048, %s28, [#allocation6], 128, 128, 8
    $region9: #{tpu_custom_call.1} parent=1 // pred_fallthru
      _
    // Predicated region
    $region10: #{tpu_custom_call.1} parent=1 // pred_check
      _
    $region11: #{tpu_custom_call.1} parent=1 // pred_check_branch
      %35 = sbr.rel (0) target = $region13
    $region12: #{tpu_custom_call.1} parent=1 // pred_region
      %36 = dma.done [#allocation3], 256
    $region13: #{tpu_custom_call.1} parent=1 // pred_fallthru
      _
    // Predicated region
    $region14: #{tpu_custom_call.1} parent=1 // pred_check
      _
    $region15: #{tpu_custom_call.1} parent=1 // pred_check_branch
      %38 = sbr.rel (0) target = $region17
    $region16: #{tpu_custom_call.1} parent=1 // pred_region
      %39 = dma.done [#allocation6], 2048
    $region17: #{tpu_custom_call.1} parent=1 // pred_fallthru
      _
    %v40 = vld [vmem:[#allocation2] sm:$0xff]
    %v41 = vld [vmem:[#allocation2 + $0x8] sm:$0xff]
    %v42 = vld [vmem:[#allocation5] sm:$0xff]
    %v43 = vld [vmem:[#allocation5 + $0x8] sm:$0xff]
    %v44 = vld [vmem:[#allocation5 + $0x10] sm:$0xff]
    %v45 = vld [vmem:[#allocation5 + $0x18] sm:$0xff]
    %v46 = vld [vmem:[#allocation5 + $0x20] sm:$0xff]
    %v47 = vld [vmem:[#allocation5 + $0x28] sm:$0xff]
    %v48 = vld [vmem:[#allocation5 + $0x30] sm:$0xff]
    %v49 = vld [vmem:[#allocation5 + $0x38] sm:$0xff]
    %v50 = vld [vmem:[#allocation5 + $0x40] sm:$0xff]
    %v51 = vld [vmem:[#allocation5 + $0x48] sm:$0xff]
    %v52 = vld [vmem:[#allocation5 + $0x50] sm:$0xff]
    %v53 = vld [vmem:[#allocation5 + $0x58] sm:$0xff]
    %v54 = vld [vmem:[#allocation5 + $0x60] sm:$0xff]
    %v55 = vld [vmem:[#allocation5 + $0x68] sm:$0xff]
    %v56 = vld [vmem:[#allocation5 + $0x70] sm:$0xff]
    %v57 = vld [vmem:[#allocation5 + $0x78] sm:$0xff]
    %58 = vmatprep.subr.mxu0 0.0
    %59 = vmatpush1.msra.mxu0 %v42
    %60 = vmatprep.subr.mxu0 0.0
    %61 = vmatpush1.msra.mxu0 %v43
    %62 = vmatprep.subr.mxu0 0.0
    %63 = vmatpush1.msra.mxu0 %v44
    %64 = vmatprep.subr.mxu0 0.0
    %65 = vmatpush1.msra.mxu0 %v45
    %66 = vmatprep.subr.mxu0 0.0
    %67 = vmatpush1.msra.mxu0 %v46
    %68 = vmatprep.subr.mxu0 0.0
    %69 = vmatpush1.msra.mxu0 %v47
    %70 = vmatprep.subr.mxu0 0.0
    %71 = vmatpush1.msra.mxu0 %v48
    %72 = vmatprep.subr.mxu0 0.0
    %73 = vmatpush1.msra.mxu0 %v49
    %74 = vmatprep.subr.mxu0 0.0
    %75 = vmatpush1.msra.mxu0 %v50
    %76 = vmatprep.subr.mxu0 0.0
    %77 = vmatpush1.msra.mxu0 %v51
    %78 = vmatprep.subr.mxu0 0.0
    %79 = vmatpush1.msra.mxu0 %v52
    %80 = vmatprep.subr.mxu0 0.0
    %81 = vmatpush1.msra.mxu0 %v53
    %82 = vmatprep.subr.mxu0 0.0
    %83 = vmatpush1.msra.mxu0 %v54
    %84 = vmatprep.subr.mxu0 0.0
    %85 = vmatpush1.msra.mxu0 %v55
    %86 = vmatprep.subr.mxu0 0.0
    %87 = vmatpush1.msra.mxu0 %v56
    %88 = vmatprep.subr.mxu0 0.0
    %89 = vmatpush1.msra.mxu0 %v57
    %90 = vmatprep.subr.mxu0 0.0
    %91 = vmatpush1.msra.mxu0 0.0
    %92 = vmatprep.subr.mxu0 0.0
    %93 = vmatpush1.msra.mxu0 0.0
    %94 = vmatprep.subr.mxu0 0.0
    %95 = vmatpush1.msra.mxu0 0.0
    %96 = vmatprep.subr.mxu0 0.0
    %97 = vmatpush1.msra.mxu0 0.0
    %98 = vmatprep.subr.mxu0 0.0
    %99 = vmatpush1.msra.mxu0 0.0
    %100 = vmatprep.subr.mxu0 0.0
    %101 = vmatpush1.msra.mxu0 0.0
    %102 = vmatprep.subr.mxu0 0.0
    %103 = vmatpush1.msra.mxu0 0.0
    %104 = vmatprep.subr.mxu0 0.0
    %105 = vmatpush1.msra.mxu0 0.0
    %106 = vmatprep.subr.mxu0 0.0
    %107 = vmatpush1.msra.mxu0 0.0
    %108 = vmatprep.subr.mxu0 0.0
    %109 = vmatpush1.msra.mxu0 0.0
    %110 = vmatprep.subr.mxu0 0.0
    %111 = vmatpush1.msra.mxu0 0.0
    %112 = vmatprep.subr.mxu0 0.0
    %113 = vmatpush1.msra.mxu0 0.0
    %114 = vmatprep.subr.mxu0 0.0
    %115 = vmatpush1.msra.mxu0 0.0
    %116 = vmatprep.subr.mxu0 0.0
    %117 = vmatpush1.msra.mxu0 0.0
    %118 = vmatprep.subr.mxu0 0.0
    %119 = vmatpush1.msra.mxu0 0.0
    %120 = vmatprep.subr.mxu0 0.0
    %121 = vmatpush1.msra.mxu0 0.0
    %122 = vmatprep.mubr.f32.mxu0 0.0
    %123 = vmatmul.mubr.f32.gmra.mrb[0].mxu0 %v40
    %v124 = vpop.f32.mrb[0].mxu0
    %v125 = vadd.f32 0.0, %v124
    %v126 = vpop.f32.mrb[0].mxu0
    %127 = vmatprep.mubr.f32.mxu0 0.0
    %128 = vmatmul.mubr.f32.gmra.mrb[0].mxu0 %v41
    %v129 = vpop.f32.mrb[0].mxu0
    %v130 = vadd.f32 0.0, %v129
    %v131 = vpop.f32.mrb[0].mxu0
    %132 = vdwg.mxu0
    %133 = vst [vmem:[#allocation7] sm:$0xff] %v125
    %134 = vst [vmem:[#allocation7 + $0x8] sm:$0xff] %v130
    // Predicated region
    $region18: #{tpu_custom_call.1} parent=1 // pred_check
      _
    $region19: #{tpu_custom_call.1} parent=1 // pred_check_branch
      %136 = sbr.rel (0) target = $region21
    $region20: #{tpu_custom_call.1} parent=1 // pred_region
      %s138 = ssub.s32 256, 256
      %139 = vsyncadd [#allocation4], %s138
      %s140 = sshll.u32 [#allocation7], 4
      %s141 = int_to_ptr.vmem [resolvable:$true] %s140
      %146 = dma.vmem_to_hbm [thread:$0]  %s141, 256, %s2, [#allocation4], 128, 128, 8
    $region21: #{tpu_custom_call.1} parent=1 // pred_fallthru
      _
    // Predicated region
    $region22: #{tpu_custom_call.1} parent=1 // pred_check
      _
    $region23: #{tpu_custom_call.1} parent=1 // pred_check_branch
      %148 = sbr.rel (0) target = $region25
    $region24: #{tpu_custom_call.1} parent=1 // pred_region
      %149 = dma.done [#allocation4], 256
    $region25: #{tpu_custom_call.1} parent=1 // pred_fallthru
      _
    %150 = vsyncpa [#allocation3], 1
    %151 = vsyncpa [#allocation6], 1
    %152 = vsyncpa [#allocation4], 1

</llo_original>
